<compile_context>
chip_gen: v7x
topology: tpu7x:2x2x1
jax: 0.10.0
libtpu: 0.0.40
codegen_flags: <defaults>
</compile_context>

<pallas_src>
import jax
import jax.numpy as jnp
from jax.experimental import pallas as pl
from jax.experimental.pallas import tpu as pltpu

LANE = 128


def _round_up(x, m):
    return (x + m - 1) // m * m


def mlp_kernel(x_ref, w1_ref, b1_ref, w2_ref, b2_ref,
               w3_ref, b3_ref, w4_ref, b4_ref, o_ref):
    # Four dependent MXU matmuls with f32 accumulation; bias add / ReLU on the
    # VPU in f32; activations are cast back to the weight dtype only to feed
    # the next matmul (all casts are no-ops on the f32 path).
    w_dtype = w1_ref.dtype
    x = x_ref[...]

    z1 = jnp.dot(x, w1_ref[...], preferred_element_type=jnp.float32) + b1_ref[...]
    # Cast a1 once; this single copy feeds both the W2 dot and the residual,
    # so only one copy stays live across the two matmuls in between.
    a1 = jnp.maximum(z1, 0.0).astype(w_dtype)

    z2 = jnp.dot(a1, w2_ref[...], preferred_element_type=jnp.float32) + b2_ref[...]
    a2 = jnp.maximum(z2, 0.0).astype(w_dtype)

    z3 = jnp.dot(a2, w3_ref[...], preferred_element_type=jnp.float32) + b3_ref[...]
    a3 = (jnp.maximum(z3, 0.0) + a1.astype(jnp.float32)).astype(w_dtype)  # residual A3 + A1

    z4 = jnp.dot(a3, w4_ref[...], preferred_element_type=jnp.float32) + b4_ref[...]
    o_ref[...] = z4.astype(o_ref.dtype)


def prepare_params(params, *, compute_dtype=jnp.float32):
    """One-time parameter prep (call once at model load; reuse across calls).

    * weights cast to compute_dtype, stored as (in, out) == torch weight.T
    * biases kept in f32 (added to the f32 MXU accumulator), shaped (1, out)
    * only the final layer's output dim (n4) is zero-padded to a lane multiple
      so the kernel's output store is lane-dense; padded lanes stay exactly 0
      and are sliced off in the wrapper.
    """
    n0, n1 = params["W1"].shape
    n2 = params["W2"].shape[1]
    n3 = params["W3"].shape[1]
    n4 = params["W4"].shape[1]
    assert n3 == n1, "residual A3 + A1 requires n_3 == n_1"
    n4p = _round_up(n4, LANE)

    def padc(a, cols):
        return jnp.pad(a, ((0, 0), (0, cols - a.shape[1])))

    prep = {
        "W1": params["W1"].astype(compute_dtype),
        "W2": params["W2"].astype(compute_dtype),
        "W3": params["W3"].astype(compute_dtype),
        "W4": padc(params["W4"].astype(compute_dtype), n4p),
        "b1": params["b1"].reshape(1, -1).astype(jnp.float32),
        "b2": params["b2"].reshape(1, -1).astype(jnp.float32),
        "b3": params["b3"].reshape(1, -1).astype(jnp.float32),
        "b4": padc(params["b4"].reshape(1, -1).astype(jnp.float32), n4p),
    }
    dims = dict(n0=n0, n1=n1, n2=n2, n3=n3, n4=n4, n4p=n4p)
    return prep, dims


def _resident_spec(shape):
    """Whole-array resident block (constant index_map), single-buffered:
    the block never changes across grid steps, so double-buffering would only
    waste VMEM."""
    kwargs = {}
    if hasattr(pl, "Buffered"):
        kwargs["pipeline_mode"] = pl.Buffered(1)
    try:
        return pl.BlockSpec(shape, lambda i: (0, 0), **kwargs)
    except TypeError:  # older jax without pipeline_mode kwarg
        return pl.BlockSpec(shape, lambda i: (0, 0))


def mlp_forward(x, prep, dims, *, tb=128, out_dtype=None):
    """x: (B, n0).  prep/dims: output of prepare_params (hoisted, one-time)."""
    B, n0 = x.shape
    assert n0 == dims["n0"]
    n1, n2, n3 = dims["n1"], dims["n2"], dims["n3"]
    n4, n4p = dims["n4"], dims["n4p"]
    compute_dtype = prep["W1"].dtype
    if out_dtype is None:
        out_dtype = x.dtype

    # Per-call prep touches ONLY x: cast + pad batch rows up to the tile size.
    sublane_pack = 16 if compute_dtype == jnp.bfloat16 else 8
    tb = min(tb, _round_up(B, sublane_pack))      # don't over-pad tiny batches
    Bp = _round_up(B, tb)
    xp = jnp.pad(x.astype(compute_dtype), ((0, Bp - B), (0, 0)))

    # Advisory cost estimate so XLA schedules around the custom call.
    w_bytes = sum(prep[k].size * prep[k].dtype.itemsize
                  for k in ("W1", "W2", "W3", "W4", "b1", "b2", "b3", "b4"))
    flops = 2 * Bp * (n0 * n1 + n1 * n2 + n2 * n3 + n3 * n4p)
    bytes_accessed = (xp.size * xp.dtype.itemsize + w_bytes
                      + Bp * n4p * jnp.dtype(out_dtype).itemsize)
    cost = pl.CostEstimate(flops=flops, transcendentals=0,
                           bytes_accessed=bytes_accessed)

    out_p = pl.pallas_call(
        mlp_kernel,
        out_shape=jax.ShapeDtypeStruct((Bp, n4p), out_dtype),
        grid_spec=pltpu.PrefetchScalarGridSpec(
            num_scalar_prefetch=0,
            grid=(Bp // tb,),
            in_specs=[
                # x: batch-tiled; feature dim left at n0 (== full array dim,
                # so no 128-lane padding needed — K padding buys nothing).
                pl.BlockSpec((tb, n0), lambda i: (i, 0)),
                _resident_spec((n0, n1)), _resident_spec((1, n1)),    # W1, b1
                _resident_spec((n1, n2)), _resident_spec((1, n2)),    # W2, b2
                _resident_spec((n2, n3)), _resident_spec((1, n3)),    # W3, b3
                _resident_spec((n3, n4p)), _resident_spec((1, n4p)),  # W4, b4
            ],
            # Output last dim padded to a 128-lane multiple -> unmasked stores.
            out_specs=pl.BlockSpec((tb, n4p), lambda i: (i, 0)),
        ),
        compiler_params=pltpu.CompilerParams(
            dimension_semantics=("parallel",)),
        cost_estimate=cost,
    )(xp, prep["W1"], prep["b1"], prep["W2"], prep["b2"],
      prep["W3"], prep["b3"], prep["W4"], prep["b4"])

    return out_p[:B, :n4]


def init_params(key, n0, n1, n2, n3, n4):
    """Deterministic init mimicking nn.Linear's uniform(-1/sqrt(fan_in), 1/sqrt(fan_in))."""
    dims = [(n0, n1), (n1, n2), (n2, n3), (n3, n4)]
    params = {}
    keys = jax.random.split(key, 2 * len(dims))
    for idx, (fin, fout) in enumerate(dims):
        bound = 1.0 / jnp.sqrt(fin)
        params[f"W{idx + 1}"] = jax.random.uniform(       # stored as (in, out) == weight.T
            keys[2 * idx], (fin, fout), jnp.float32, -bound, bound)
        params[f"b{idx + 1}"] = jax.random.uniform(
            keys[2 * idx + 1], (1, fout), jnp.float32, -bound, bound)
    return params


def reference_forward(x, p):
    a1 = jnp.maximum(x @ p["W1"] + p["b1"], 0.0)
    a2 = jnp.maximum(a1 @ p["W2"] + p["b2"], 0.0)
    a3 = jnp.maximum(a2 @ p["W3"] + p["b3"], 0.0) + a1
    return a3 @ p["W4"] + p["b4"]


if __name__ == "__main__":
    # Small shapes consistent with Model(n_0, n_1, n_2, n_3, n_4); the residual
    # A3 + A1 requires n_3 == n_1.  B=256 with tb=128 gives a 2-step grid
    # (keeps both v7x TensorCores busy) while staying tiny.
    B, n0, n1, n2, n3, n4 = 256, 32, 64, 128, 64, 16

    key = jax.random.PRNGKey(0)
    kx, kp = jax.random.split(key)
    x = jax.random.normal(kx, (B, n0), jnp.float32)
    params = init_params(kp, n0, n1, n2, n3, n4)
    ref = reference_forward(x, params)

    # f32 compute path (one-time param prep hoisted out of the call): tight check.
    prep_f32, dims_f32 = prepare_params(params, compute_dtype=jnp.float32)
    out_f32 = jax.block_until_ready(mlp_forward(x, prep_f32, dims_f32, tb=128))
    assert out_f32.shape == (B, n4)
    assert jnp.allclose(out_f32, ref, atol=1e-4, rtol=1e-4)

    # bf16 compute path (MXU-native weights/activations, f32 accumulation): loose check.
    prep_bf16, dims_bf16 = prepare_params(params, compute_dtype=jnp.bfloat16)
    out_bf16 = jax.block_until_ready(mlp_forward(x, prep_bf16, dims_bf16, tb=128))
    assert out_bf16.shape == (B, n4)
    assert jnp.allclose(out_bf16, ref, atol=1e-1, rtol=1e-1)

    print("KERNEL_OK")
</pallas_src>

<mosaic_0001>
module attributes {stable_mosaic.version = 11 : i64} {
  func.func @mlp_kernel(%arg0: i32, %arg1: memref<128x32xf32, #tpu.memory_space<vmem>>, %arg2: memref<32x64xf32, #tpu.memory_space<vmem>>, %arg3: memref<1x64xf32, #tpu.memory_space<vmem>>, %arg4: memref<64x128xf32, #tpu.memory_space<vmem>>, %arg5: memref<1x128xf32, #tpu.memory_space<vmem>>, %arg6: memref<128x64xf32, #tpu.memory_space<vmem>>, %arg7: memref<1x64xf32, #tpu.memory_space<vmem>>, %arg8: memref<64x128xf32, #tpu.memory_space<vmem>>, %arg9: memref<1x128xf32, #tpu.memory_space<vmem>>, %arg10: memref<128x128xf32, #tpu.memory_space<vmem>>) attributes {dimension_semantics = [#tpu.dimension_semantics<parallel>], iteration_bounds = array<i64: 2>, scalar_prefetch = 0 : i64, scratch_operands = 0 : i64, tpu.core_type = #tpu.core_type<tc>, window_params = [{transform_indices = @transform_0, window_bounds = array<i64: 128, 32>}, {pipeline_mode = #tpu.pipeline_mode<synchronous>, transform_indices = @transform_1, window_bounds = array<i64: 32, 64>}, {pipeline_mode = #tpu.pipeline_mode<synchronous>, transform_indices = @transform_2, window_bounds = array<i64: 1, 64>}, {pipeline_mode = #tpu.pipeline_mode<synchronous>, transform_indices = @transform_3, window_bounds = array<i64: 64, 128>}, {pipeline_mode = #tpu.pipeline_mode<synchronous>, transform_indices = @transform_4, window_bounds = array<i64: 1, 128>}, {pipeline_mode = #tpu.pipeline_mode<synchronous>, transform_indices = @transform_5, window_bounds = array<i64: 128, 64>}, {pipeline_mode = #tpu.pipeline_mode<synchronous>, transform_indices = @transform_6, window_bounds = array<i64: 1, 64>}, {pipeline_mode = #tpu.pipeline_mode<synchronous>, transform_indices = @transform_7, window_bounds = array<i64: 64, 128>}, {pipeline_mode = #tpu.pipeline_mode<synchronous>, transform_indices = @transform_8, window_bounds = array<i64: 1, 128>}, {transform_indices = @transform_9, window_bounds = array<i64: 128, 128>}]} {
    %c0 = arith.constant 0 : index
    %c0_0 = arith.constant 0 : index
    %0 = vector.load %arg1[%c0, %c0_0] : memref<128x32xf32, #tpu.memory_space<vmem>>, vector<128x32xf32>
    %c0_1 = arith.constant 0 : index
    %c0_2 = arith.constant 0 : index
    %1 = vector.load %arg2[%c0_1, %c0_2] : memref<32x64xf32, #tpu.memory_space<vmem>>, vector<32x64xf32>
    %cst = arith.constant dense<0.000000e+00> : vector<128x64xf32>
    %2 = tpu.matmul %0, %1, %cst {dimension_numbers = #tpu.dot_dimension_numbers<[1], [0], [0], [1], [0, 0, 1, 1], [], []>} : vector<128x32xf32>, vector<32x64xf32>, vector<128x64xf32> -> vector<128x64xf32>
    %c0_3 = arith.constant 0 : index
    %c0_4 = arith.constant 0 : index
    %3 = vector.load %arg3[%c0_3, %c0_4] : memref<1x64xf32, #tpu.memory_space<vmem>>, vector<1x64xf32>
    %4 = vector.broadcast %3 : vector<1x64xf32> to vector<128x64xf32>
    %5 = arith.addf %2, %4 : vector<128x64xf32>
    %cst_5 = arith.constant 0.000000e+00 : f32
    %6 = vector.broadcast %cst_5 : f32 to vector<128x64xf32>
    %7 = arith.maximumf %5, %6 : vector<128x64xf32>
    %c0_6 = arith.constant 0 : index
    %c0_7 = arith.constant 0 : index
    %8 = vector.load %arg4[%c0_6, %c0_7] : memref<64x128xf32, #tpu.memory_space<vmem>>, vector<64x128xf32>
    %cst_8 = arith.constant dense<0.000000e+00> : vector<128x128xf32>
    %9 = tpu.matmul %7, %8, %cst_8 {dimension_numbers = #tpu.dot_dimension_numbers<[1], [0], [0], [1], [0, 0, 1, 1], [], []>} : vector<128x64xf32>, vector<64x128xf32>, vector<128x128xf32> -> vector<128x128xf32>
    %c0_9 = arith.constant 0 : index
    %c0_10 = arith.constant 0 : index
    %10 = vector.load %arg5[%c0_9, %c0_10] : memref<1x128xf32, #tpu.memory_space<vmem>>, vector<1x128xf32>
    %11 = vector.broadcast %10 : vector<1x128xf32> to vector<128x128xf32>
    %12 = arith.addf %9, %11 : vector<128x128xf32>
    %cst_11 = arith.constant 0.000000e+00 : f32
    %13 = vector.broadcast %cst_11 : f32 to vector<128x128xf32>
    %14 = arith.maximumf %12, %13 : vector<128x128xf32>
    %c0_12 = arith.constant 0 : index
    %c0_13 = arith.constant 0 : index
    %15 = vector.load %arg6[%c0_12, %c0_13] : memref<128x64xf32, #tpu.memory_space<vmem>>, vector<128x64xf32>
    %cst_14 = arith.constant dense<0.000000e+00> : vector<128x64xf32>
    %16 = tpu.matmul %14, %15, %cst_14 {dimension_numbers = #tpu.dot_dimension_numbers<[1], [0], [0], [1], [0, 0, 1, 1], [], []>} : vector<128x128xf32>, vector<128x64xf32>, vector<128x64xf32> -> vector<128x64xf32>
    %c0_15 = arith.constant 0 : index
    %c0_16 = arith.constant 0 : index
    %17 = vector.load %arg7[%c0_15, %c0_16] : memref<1x64xf32, #tpu.memory_space<vmem>>, vector<1x64xf32>
    %18 = vector.broadcast %17 : vector<1x64xf32> to vector<128x64xf32>
    %19 = arith.addf %16, %18 : vector<128x64xf32>
    %cst_17 = arith.constant 0.000000e+00 : f32
    %20 = vector.broadcast %cst_17 : f32 to vector<128x64xf32>
    %21 = arith.maximumf %19, %20 : vector<128x64xf32>
    %22 = arith.addf %21, %7 : vector<128x64xf32>
    %c0_18 = arith.constant 0 : index
    %c0_19 = arith.constant 0 : index
    %23 = vector.load %arg8[%c0_18, %c0_19] : memref<64x128xf32, #tpu.memory_space<vmem>>, vector<64x128xf32>
    %cst_20 = arith.constant dense<0.000000e+00> : vector<128x128xf32>
    %24 = tpu.matmul %22, %23, %cst_20 {dimension_numbers = #tpu.dot_dimension_numbers<[1], [0], [0], [1], [0, 0, 1, 1], [], []>} : vector<128x64xf32>, vector<64x128xf32>, vector<128x128xf32> -> vector<128x128xf32>
    %c0_21 = arith.constant 0 : index
    %c0_22 = arith.constant 0 : index
    %25 = vector.load %arg9[%c0_21, %c0_22] : memref<1x128xf32, #tpu.memory_space<vmem>>, vector<1x128xf32>
    %26 = vector.broadcast %25 : vector<1x128xf32> to vector<128x128xf32>
    %27 = arith.addf %24, %26 : vector<128x128xf32>
    %c0_23 = arith.constant 0 : index
    %c0_24 = arith.constant 0 : index
    %28 = vector.load %arg10[%c0_23, %c0_24] : memref<128x128xf32, #tpu.memory_space<vmem>>, vector<128x128xf32>
    tpu.vector_store %arg10[%c0_23, %c0_24], %27 {strides = array<i32>} : memref<128x128xf32, #tpu.memory_space<vmem>>, vector<128x128xf32>,
    return
  }
  func.func @transform_0(%arg0: i32) -> (i32, i32) {
    %c0_i32 = arith.constant 0 : i32
    %c0_i32_0 = arith.constant 0 : i32
    return %arg0, %c0_i32 : i32, i32
  }
  func.func @transform_1(%arg0: i32) -> (i32, i32) {
    %c0_i32 = arith.constant 0 : i32
    %c0_i32_0 = arith.constant 0 : i32
    %c0_i32_1 = arith.constant 0 : i32
    return %c0_i32, %c0_i32_0 : i32, i32
  }
  func.func @transform_2(%arg0: i32) -> (i32, i32) {
    %c0_i32 = arith.constant 0 : i32
    %c0_i32_0 = arith.constant 0 : i32
    %c0_i32_1 = arith.constant 0 : i32
    return %c0_i32, %c0_i32_0 : i32, i32
  }
  func.func @transform_3(%arg0: i32) -> (i32, i32) {
    %c0_i32 = arith.constant 0 : i32
    %c0_i32_0 = arith.constant 0 : i32
    %c0_i32_1 = arith.constant 0 : i32
    return %c0_i32, %c0_i32_0 : i32, i32
  }
  func.func @transform_4(%arg0: i32) -> (i32, i32) {
    %c0_i32 = arith.constant 0 : i32
    %c0_i32_0 = arith.constant 0 : i32
    %c0_i32_1 = arith.constant 0 : i32
    return %c0_i32, %c0_i32_0 : i32, i32
  }
  func.func @transform_5(%arg0: i32) -> (i32, i32) {
    %c0_i32 = arith.constant 0 : i32
    %c0_i32_0 = arith.constant 0 : i32
    %c0_i32_1 = arith.constant 0 : i32
    return %c0_i32, %c0_i32_0 : i32, i32
  }
  func.func @transform_6(%arg0: i32) -> (i32, i32) {
    %c0_i32 = arith.constant 0 : i32
    %c0_i32_0 = arith.constant 0 : i32
    %c0_i32_1 = arith.constant 0 : i32
    return %c0_i32, %c0_i32_0 : i32, i32
  }
  func.func @transform_7(%arg0: i32) -> (i32, i32) {
    %c0_i32 = arith.constant 0 : i32
    %c0_i32_0 = arith.constant 0 : i32
    %c0_i32_1 = arith.constant 0 : i32
    return %c0_i32, %c0_i32_0 : i32, i32
  }
  func.func @transform_8(%arg0: i32) -> (i32, i32) {
    %c0_i32 = arith.constant 0 : i32
    %c0_i32_0 = arith.constant 0 : i32
    %c0_i32_1 = arith.constant 0 : i32
    return %c0_i32, %c0_i32_0 : i32, i32
  }
  func.func @transform_9(%arg0: i32) -> (i32, i32) {
    %c0_i32 = arith.constant 0 : i32
    %c0_i32_0 = arith.constant 0 : i32
    return %arg0, %c0_i32 : i32, i32
  }
}

</mosaic_0001>

<llo_original>
// kernel: tpu_custom_call.1
$region0: #{tpu_custom_call.1}
  #allocation0 [shape = 'u32[]', space=smem, size = 0x4, offset = 0x4, fixed_abs, tag = 'smem constant byte address 0x4 - core index']
  #allocation1 [shape = 'u32[144,128]{1,0:T(1,128)}', space=vmem, size = 0x12000, scoped, tag = 'internal scratch']
  %s0 = inlined_call_operand.vmem [shape: f32[256,32], index: 0, kind: input, shape index: {}]
  %s1 = inlined_call_operand.vmem [shape: f32[32,64], index: 1, kind: input, shape index: {}]
  %s2 = inlined_call_operand.vmem [shape: f32[1,64], index: 2, kind: input, shape index: {}]
  %s3 = inlined_call_operand.vmem [shape: f32[64,128], index: 3, kind: input, shape index: {}]
  %s4 = inlined_call_operand.vmem [shape: f32[1,128], index: 4, kind: input, shape index: {}]
  %s5 = inlined_call_operand.vmem [shape: f32[128,64], index: 5, kind: input, shape index: {}]
  %s6 = inlined_call_operand.vmem [shape: f32[1,64], index: 6, kind: input, shape index: {}]
  %s7 = inlined_call_operand.vmem [shape: f32[64,128], index: 7, kind: input, shape index: {}]
  %s8 = inlined_call_operand.vmem [shape: f32[1,128], index: 8, kind: input, shape index: {}]
  %s9 = inlined_call_operand.hbm [shape: f32[256,128], index: 9, kind: output, shape index: {}]
  %s10 = sld [smem:[#allocation0]]
  $region69: #{tpu_custom_call.1} parent=0
    _
  %s12 = ssub.s32 1, %s10
  %s13 = scalar_select 0, %s12, %s10
  $region1: #{tpu_custom_call.1} parent=0
    #allocation2 [shape = 'u8[131072]{0}', space=vmem, size = 0x20000, scoped, tag = 'output window, operand 0']
    #allocation3 [shape = 's32[2]{0}', space=sflag, size = 0x8, scoped, tag = 'scoped memory for tpu_custom_call.1']
    %14 = vsyncpa [#allocation3], 0
    %s15 = scalar_lea.sflag [#allocation3], 1
    %16 = vsyncpa %s15, 0
    loop: start=0, step=1, limit=4
    $region2: #{tpu_custom_call.1} parent=1 // loop_pre_header
      _
    $region3: #{tpu_custom_call.1} parent=1 // loop_header
      %s18 = sphi 0, %s22
      %p19 = scmp.ge.s32.totalorder %s18, 4
      %s28 = sphi 0, %s30
      %s31 = sphi 0, %s28
      %s32 = sphi 0, %s31
      %s48 = sphi 0, %s32
      %s52 = sphi 0, %s52
      %s54 = sphi 0, %s52
      %s55 = sphi 0, %s54
      %s69 = sphi 0, %s55
      %s73 = sphi 0, %s73
      %s75 = sphi 0, %s73
      %s76 = sphi 0, %s75
      %s90 = sphi 0, %s76
      %s94 = sphi 0, %s94
      %s96 = sphi 0, %s94
      %s97 = sphi 0, %s96
      %s111 = sphi 0, %s97
      %s115 = sphi 0, %s115
      %s117 = sphi 0, %s115
      %s118 = sphi 0, %s117
      %s132 = sphi 0, %s118
      %s136 = sphi 0, %s136
      %s138 = sphi 0, %s136
      %s139 = sphi 0, %s138
      %s153 = sphi 0, %s139
      %s157 = sphi 0, %s157
      %s159 = sphi 0, %s157
      %s160 = sphi 0, %s159
      %s174 = sphi 0, %s160
      %s178 = sphi 0, %s178
      %s180 = sphi 0, %s178
      %s181 = sphi 0, %s180
      %s195 = sphi 0, %s181
      %s199 = sphi 0, %s199
      %s201 = sphi 0, %s199
      %s202 = sphi 0, %s201
      %s216 = sphi 0, %s202
      %s222 = sphi 0, %s224
      %s225 = sphi 0, %s222
      %s226 = sphi 0, %s225
      %s242 = sphi 0, %s226
    $region4: #{tpu_custom_call.1} parent=1 // loop_header_branch
      %21 = sbr.rel (%p19) target = $region8
    $region5: #{tpu_custom_call.1} parent=1 // loop_body
      %s23 = ssub.s32 %s18, 1
      %s24 = ssub.s32 %s18, 2
      %s25 = sadd.s32 %s18, 1
      %s26 = ssub.s32 %s18, %s25
      %p27 = scmp.eq.s32.totalorder %s26, 0
      %s29 = sadd.s32 %s28, 1
      %s30 = scalar_select %p27, %s28, %s29
      %p33 = pneg %p27
      %p34 = scmp.eq.s32.totalorder %s18, 1
      %p35 = por %p33, %p34
      %p36 = scmp.ne.s32.totalorder %s28, %s31
      %p37 = scmp.eq.s32.totalorder %s18, 0
      %p38 = por %p36, %p37
      %p39 = scmp.ne.s32.totalorder %s28, %s31
      %p40 = scmp.eq.s32.totalorder %s23, 1
      %p41 = por %p39, %p40
      %p42 = scmp.ne.s32.totalorder %s31, %s32
      %p43 = scmp.eq.s32.totalorder %s23, 0
      %p44 = por %p42, %p43
      %p45 = scmp.ne.s32.totalorder %s31, %s32
      %p46 = scmp.eq.s32.totalorder %s24, 1
      %p47 = por %p45, %p46
      %p49 = scmp.ne.s32.totalorder %s32, %s48
      %p50 = scmp.eq.s32.totalorder %s24, 0
      %p51 = por %p49, %p50
      %s53 = sadd.s32 %s52, 1
      %p56 = scmp.eq.s32.totalorder %s18, 1
      %p57 = scmp.ne.s32.totalorder %s52, %s54
      %p58 = scmp.eq.s32.totalorder %s18, 0
      %p59 = por %p57, %p58
      %p60 = scmp.ne.s32.totalorder %s52, %s54
      %p61 = scmp.eq.s32.totalorder %s23, 1
      %p62 = por %p60, %p61
      %p63 = scmp.ne.s32.totalorder %s54, %s55
      %p64 = scmp.eq.s32.totalorder %s23, 0
      %p65 = por %p63, %p64
      %p66 = scmp.ne.s32.totalorder %s54, %s55
      %p67 = scmp.eq.s32.totalorder %s24, 1
      %p68 = por %p66, %p67
      %p70 = scmp.ne.s32.totalorder %s55, %s69
      %p71 = scmp.eq.s32.totalorder %s24, 0
      %p72 = por %p70, %p71
      %s74 = sadd.s32 %s73, 1
      %p77 = scmp.eq.s32.totalorder %s18, 1
      %p78 = scmp.ne.s32.totalorder %s73, %s75
      %p79 = scmp.eq.s32.totalorder %s18, 0
      %p80 = por %p78, %p79
      %p81 = scmp.ne.s32.totalorder %s73, %s75
      %p82 = scmp.eq.s32.totalorder %s23, 1
      %p83 = por %p81, %p82
      %p84 = scmp.ne.s32.totalorder %s75, %s76
      %p85 = scmp.eq.s32.totalorder %s23, 0
      %p86 = por %p84, %p85
      %p87 = scmp.ne.s32.totalorder %s75, %s76
      %p88 = scmp.eq.s32.totalorder %s24, 1
      %p89 = por %p87, %p88
      %p91 = scmp.ne.s32.totalorder %s76, %s90
      %p92 = scmp.eq.s32.totalorder %s24, 0
      %p93 = por %p91, %p92
      %s95 = sadd.s32 %s94, 1
      %p98 = scmp.eq.s32.totalorder %s18, 1
      %p99 = scmp.ne.s32.totalorder %s94, %s96
      %p100 = scmp.eq.s32.totalorder %s18, 0
      %p101 = por %p99, %p100
      %p102 = scmp.ne.s32.totalorder %s94, %s96
      %p103 = scmp.eq.s32.totalorder %s23, 1
      %p104 = por %p102, %p103
      %p105 = scmp.ne.s32.totalorder %s96, %s97
      %p106 = scmp.eq.s32.totalorder %s23, 0
      %p107 = por %p105, %p106
      %p108 = scmp.ne.s32.totalorder %s96, %s97
      %p109 = scmp.eq.s32.totalorder %s24, 1
      %p110 = por %p108, %p109
      %p112 = scmp.ne.s32.totalorder %s97, %s111
      %p113 = scmp.eq.s32.totalorder %s24, 0
      %p114 = por %p112, %p113
      %s116 = sadd.s32 %s115, 1
      %p119 = scmp.eq.s32.totalorder %s18, 1
      %p120 = scmp.ne.s32.totalorder %s115, %s117
      %p121 = scmp.eq.s32.totalorder %s18, 0
      %p122 = por %p120, %p121
      %p123 = scmp.ne.s32.totalorder %s115, %s117
      %p124 = scmp.eq.s32.totalorder %s23, 1
      %p125 = por %p123, %p124
      %p126 = scmp.ne.s32.totalorder %s117, %s118
      %p127 = scmp.eq.s32.totalorder %s23, 0
      %p128 = por %p126, %p127
      %p129 = scmp.ne.s32.totalorder %s117, %s118
      %p130 = scmp.eq.s32.totalorder %s24, 1
      %p131 = por %p129, %p130
      %p133 = scmp.ne.s32.totalorder %s118, %s132
      %p134 = scmp.eq.s32.totalorder %s24, 0
      %p135 = por %p133, %p134
      %s137 = sadd.s32 %s136, 1
      %p140 = scmp.eq.s32.totalorder %s18, 1
      %p141 = scmp.ne.s32.totalorder %s136, %s138
      %p142 = scmp.eq.s32.totalorder %s18, 0
      %p143 = por %p141, %p142
      %p144 = scmp.ne.s32.totalorder %s136, %s138
      %p145 = scmp.eq.s32.totalorder %s23, 1
      %p146 = por %p144, %p145
      %p147 = scmp.ne.s32.totalorder %s138, %s139
      %p148 = scmp.eq.s32.totalorder %s23, 0
      %p149 = por %p147, %p148
      %p150 = scmp.ne.s32.totalorder %s138, %s139
      %p151 = scmp.eq.s32.totalorder %s24, 1
      %p152 = por %p150, %p151
      %p154 = scmp.ne.s32.totalorder %s139, %s153
      %p155 = scmp.eq.s32.totalorder %s24, 0
      %p156 = por %p154, %p155
      %s158 = sadd.s32 %s157, 1
      %p161 = scmp.eq.s32.totalorder %s18, 1
      %p162 = scmp.ne.s32.totalorder %s157, %s159
      %p163 = scmp.eq.s32.totalorder %s18, 0
      %p164 = por %p162, %p163
      %p165 = scmp.ne.s32.totalorder %s157, %s159
      %p166 = scmp.eq.s32.totalorder %s23, 1
      %p167 = por %p165, %p166
      %p168 = scmp.ne.s32.totalorder %s159, %s160
      %p169 = scmp.eq.s32.totalorder %s23, 0
      %p170 = por %p168, %p169
      %p171 = scmp.ne.s32.totalorder %s159, %s160
      %p172 = scmp.eq.s32.totalorder %s24, 1
      %p173 = por %p171, %p172
      %p175 = scmp.ne.s32.totalorder %s160, %s174
      %p176 = scmp.eq.s32.totalorder %s24, 0
      %p177 = por %p175, %p176
      %s179 = sadd.s32 %s178, 1
      %p182 = scmp.eq.s32.totalorder %s18, 1
      %p183 = scmp.ne.s32.totalorder %s178, %s180
      %p184 = scmp.eq.s32.totalorder %s18, 0
      %p185 = por %p183, %p184
      %p186 = scmp.ne.s32.totalorder %s178, %s180
      %p187 = scmp.eq.s32.totalorder %s23, 1
      %p188 = por %p186, %p187
      %p189 = scmp.ne.s32.totalorder %s180, %s181
      %p190 = scmp.eq.s32.totalorder %s23, 0
      %p191 = por %p189, %p190
      %p192 = scmp.ne.s32.totalorder %s180, %s181
      %p193 = scmp.eq.s32.totalorder %s24, 1
      %p194 = por %p192, %p193
      %p196 = scmp.ne.s32.totalorder %s181, %s195
      %p197 = scmp.eq.s32.totalorder %s24, 0
      %p198 = por %p196, %p197
      %s200 = sadd.s32 %s199, 1
      %p203 = scmp.eq.s32.totalorder %s18, 1
      %p204 = scmp.ne.s32.totalorder %s199, %s201
      %p205 = scmp.eq.s32.totalorder %s18, 0
      %p206 = por %p204, %p205
      %p207 = scmp.ne.s32.totalorder %s199, %s201
      %p208 = scmp.eq.s32.totalorder %s23, 1
      %p209 = por %p207, %p208
      %p210 = scmp.ne.s32.totalorder %s201, %s202
      %p211 = scmp.eq.s32.totalorder %s23, 0
      %p212 = por %p210, %p211
      %p213 = scmp.ne.s32.totalorder %s201, %s202
      %p214 = scmp.eq.s32.totalorder %s24, 1
      %p215 = por %p213, %p214
      %p217 = scmp.ne.s32.totalorder %s202, %s216
      %p218 = scmp.eq.s32.totalorder %s24, 0
      %p219 = por %p217, %p218
      %s220 = ssub.s32 %s18, %s25
      %p221 = scmp.eq.s32.totalorder %s220, 0
      %s223 = sadd.s32 %s222, 1
      %s224 = scalar_select %p221, %s222, %s223
      %p227 = pneg %p221
      %p228 = scmp.eq.s32.totalorder %s18, 1
      %p229 = por %p227, %p228
      %p230 = scmp.ne.s32.totalorder %s222, %s225
      %p231 = scmp.eq.s32.totalorder %s18, 0
      %p232 = por %p230, %p231
      %p233 = scmp.ne.s32.totalorder %s222, %s225
      %p234 = scmp.eq.s32.totalorder %s23, 1
      %p235 = por %p233, %p234
      %p236 = scmp.ne.s32.totalorder %s225, %s226
      %p237 = scmp.eq.s32.totalorder %s23, 0
      %p238 = por %p236, %p237
      %p239 = scmp.ne.s32.totalorder %s225, %s226
      %p240 = scmp.eq.s32.totalorder %s24, 1
      %p241 = por %p239, %p240
      %p243 = scmp.ne.s32.totalorder %s226, %s242
      %p244 = scmp.eq.s32.totalorder %s24, 0
      %p245 = por %p243, %p244
      %p246 = scmp.le.s32.totalorder 1, %s18
      %p247 = scmp.lt.s32.totalorder %s18, 3
      %p248 = pnand %p246, %p247
      %p249 = pneg %p248
      // Predicated region
      $region9: #{tpu_custom_call.1} parent=5 // pred_check
        _
      $region10: #{tpu_custom_call.1} parent=5 // pred_check_branch
        %251 = sbr.rel (%p248) target = $region12
      $region11: #{tpu_custom_call.1} parent=5 // pred_region
        %s252 = ssub.s32 %s18, 1
        // Predicated region
        $region13: #{tpu_custom_call.1} parent=11 // pred_check
          %p253 = pneg %p65
        $region14: #{tpu_custom_call.1} parent=11 // pred_check_branch
          %255 = sbr.rel (%p253) target = $region16
        $region15: #{tpu_custom_call.1} parent=11 // pred_region
          _
        $region16: #{tpu_custom_call.1} parent=11 // pred_fallthru
          _
        // Predicated region
        $region17: #{tpu_custom_call.1} parent=11 // pred_check
          %p256 = pneg %p86
        $region18: #{tpu_custom_call.1} parent=11 // pred_check_branch
          %258 = sbr.rel (%p256) target = $region20
        $region19: #{tpu_custom_call.1} parent=11 // pred_region
          _
        $region20: #{tpu_custom_call.1} parent=11 // pred_fallthru
          _
        // Predicated region
        $region21: #{tpu_custom_call.1} parent=11 // pred_check
          %p259 = pneg %p107
        $region22: #{tpu_custom_call.1} parent=11 // pred_check_branch
          %261 = sbr.rel (%p259) target = $region24
        $region23: #{tpu_custom_call.1} parent=11 // pred_region
          _
        $region24: #{tpu_custom_call.1} parent=11 // pred_fallthru
          _
        // Predicated region
        $region25: #{tpu_custom_call.1} parent=11 // pred_check
          %p262 = pneg %p128
        $region26: #{tpu_custom_call.1} parent=11 // pred_check_branch
          %264 = sbr.rel (%p262) target = $region28
        $region27: #{tpu_custom_call.1} parent=11 // pred_region
          _
        $region28: #{tpu_custom_call.1} parent=11 // pred_fallthru
          _
        // Predicated region
        $region29: #{tpu_custom_call.1} parent=11 // pred_check
          %p265 = pneg %p149
        $region30: #{tpu_custom_call.1} parent=11 // pred_check_branch
          %267 = sbr.rel (%p265) target = $region32
        $region31: #{tpu_custom_call.1} parent=11 // pred_region
          _
        $region32: #{tpu_custom_call.1} parent=11 // pred_fallthru
          _
        // Predicated region
        $region33: #{tpu_custom_call.1} parent=11 // pred_check
          %p268 = pneg %p170
        $region34: #{tpu_custom_call.1} parent=11 // pred_check_branch
          %270 = sbr.rel (%p268) target = $region36
        $region35: #{tpu_custom_call.1} parent=11 // pred_region
          _
        $region36: #{tpu_custom_call.1} parent=11 // pred_fallthru
          _
        // Predicated region
        $region37: #{tpu_custom_call.1} parent=11 // pred_check
          %p271 = pneg %p191
        $region38: #{tpu_custom_call.1} parent=11 // pred_check_branch
          %273 = sbr.rel (%p271) target = $region40
        $region39: #{tpu_custom_call.1} parent=11 // pred_region
          _
        $region40: #{tpu_custom_call.1} parent=11 // pred_fallthru
          _
        // Predicated region
        $region41: #{tpu_custom_call.1} parent=11 // pred_check
          %p274 = pneg %p212
        $region42: #{tpu_custom_call.1} parent=11 // pred_check_branch
          %276 = sbr.rel (%p274) target = $region44
        $region43: #{tpu_custom_call.1} parent=11 // pred_region
          _
        $region44: #{tpu_custom_call.1} parent=11 // pred_fallthru
          _
      $region12: #{tpu_custom_call.1} parent=5 // pred_fallthru
        _
      %p277 = scmp.lt.s32.totalorder %s18, 2
      // Predicated region
      $region45: #{tpu_custom_call.1} parent=5 // pred_check
        %p278 = pneg %p277
      $region46: #{tpu_custom_call.1} parent=5 // pred_check_branch
        %280 = sbr.rel (%p278) target = $region48
      $region47: #{tpu_custom_call.1} parent=5 // pred_region
        // Predicated region
        $region49: #{tpu_custom_call.1} parent=47 // pred_check
          %p281 = pneg %p38
        $region50: #{tpu_custom_call.1} parent=47 // pred_check_branch
          %283 = sbr.rel (%p281) target = $region52
        $region51: #{tpu_custom_call.1} parent=47 // pred_region
          %s284 = smul.u32 16, %s18
          %p285 = scmp.lt.s32.totalorder %s284, 31
          %s286 = scalar_select %p285, %s284, 31
          %s287 = smul.addr %s286, 8
          %s288 = scalar_lea.vmem %s0, %s287
          %s289 = smul.u32 16, %s18
        $region52: #{tpu_custom_call.1} parent=47 // pred_fallthru
          _
      $region48: #{tpu_custom_call.1} parent=5 // pred_fallthru
        _
      %p290 = scmp.le.s32.totalorder 1, %s18
      %p291 = scmp.lt.s32.totalorder %s18, 3
      %p292 = pnand %p290, %p291
      %p293 = pneg %p292
      // Predicated region
      $region53: #{tpu_custom_call.1} parent=5 // pred_check
        _
      $region54: #{tpu_custom_call.1} parent=5 // pred_check_branch
        %295 = sbr.rel (%p292) target = $region56
      $region55: #{tpu_custom_call.1} parent=5 // pred_region
        %s296 = ssub.s32 %s18, 1
        %s297 = smul.u32 16, %s23
        %p298 = scmp.lt.s32.totalorder %s297, 31
        %s299 = scalar_select %p298, %s297, 31
        %s300 = smul.addr %s299, 8
        %s301 = scalar_lea.vmem %s0, %s300
        %p302 = pneg %p44
        %p303 = pneg %p41
        %p304 = pneg %p65
        %p305 = pneg %p62
        %p306 = pneg %p86
        %p307 = pneg %p83
        %p308 = pneg %p107
        %p309 = pneg %p104
        %p310 = pneg %p128
        %p311 = pneg %p125
        %p312 = pneg %p149
        %p313 = pneg %p146
        %p314 = pneg %p170
        %p315 = pneg %p167
        %p316 = pneg %p191
        %p317 = pneg %p188
        %p318 = pneg %p212
        %p319 = pneg %p209
        %p320 = pneg %p238
        %p321 = pneg %p235
        %s322 = sand.u32 %s225, 1
        %s323 = scalar_lea.sflag [#allocation3], %s322
        %s324 = sand.u32 %s225, 1
        %s325 = smul.addr %s324, 128
        %s326 = scalar_lea.vmem [#allocation2], %s325
        %s327 = smul.u32 16, %s23
        %p328 = scmp.lt.s32.totalorder %s327, 31
        %s329 = scalar_select %p328, %s327, 31
        %s330 = smul.addr %s329, 8
        %s331 = scalar_lea.vmem %s0, %s330
        %s332 = smul.u32 16, %s23
        %s333 = smul.u32 16, %s23
        %v334 = vld [vmem:[%s331] sm:$0xff]
        %v335 = vld [vmem:[%s331 + $0x8] sm:$0xff]
        %v336 = vld [vmem:[%s331 + $0x10] sm:$0xff]
        %v337 = vld [vmem:[%s331 + $0x18] sm:$0xff]
        %v338 = vld [vmem:[%s331 + $0x20] sm:$0xff]
        %v339 = vld [vmem:[%s331 + $0x28] sm:$0xff]
        %v340 = vld [vmem:[%s331 + $0x30] sm:$0xff]
        %v341 = vld [vmem:[%s331 + $0x38] sm:$0xff]
        %v342 = vld [vmem:[%s331 + $0x40] sm:$0xff]
        %v343 = vld [vmem:[%s331 + $0x48] sm:$0xff]
        %v344 = vld [vmem:[%s331 + $0x50] sm:$0xff]
        %v345 = vld [vmem:[%s331 + $0x58] sm:$0xff]
        %v346 = vld [vmem:[%s331 + $0x60] sm:$0xff]
        %v347 = vld [vmem:[%s331 + $0x68] sm:$0xff]
        %v348 = vld [vmem:[%s331 + $0x70] sm:$0xff]
        %v349 = vld [vmem:[%s331 + $0x78] sm:$0xff]
        %v350 = vld [vmem:[%s1] sm:$0xff]
        %v351 = vld [vmem:[%s1 + $0x8] sm:$0xff]
        %v352 = vld [vmem:[%s1 + $0x10] sm:$0xff]
        %v353 = vld [vmem:[%s1 + $0x18] sm:$0xff]
        %v354 = vld [vmem:[%s2] sm:$0x1]
        %v356 = vlaneseq
        %v357 = vshrl.u32 %v356, 7
        %v358 = vsub.s32 0, %v357
        %v359 = vrot.slane %v354, %v358
        %vm361 = vcmask 261120
        %v363 = vsel %vm361, %v334, 0
        %v366 = vsel %vm361, %v335, 0
        %v369 = vsel %vm361, %v336, 0
        %v372 = vsel %vm361, %v337, 0
        %v375 = vsel %vm361, %v338, 0
        %v378 = vsel %vm361, %v339, 0
        %v381 = vsel %vm361, %v340, 0
        %v384 = vsel %vm361, %v341, 0
        %v387 = vsel %vm361, %v342, 0
        %v390 = vsel %vm361, %v343, 0
        %v393 = vsel %vm361, %v344, 0
        %v396 = vsel %vm361, %v345, 0
        %v399 = vsel %vm361, %v346, 0
        %v402 = vsel %vm361, %v347, 0
        %v405 = vsel %vm361, %v348, 0
        %v408 = vsel %vm361, %v349, 0
        %410 = vmatprep.subr.mxu0 0.0
        %411 = vmatpush1.msra.mxu0 %v350
        %412 = vmatprep.subr.mxu0 0.0
        %413 = vmatpush1.msra.mxu0 %v351
        %414 = vmatprep.subr.mxu0 0.0
        %415 = vmatpush1.msra.mxu0 %v352
        %416 = vmatprep.subr.mxu0 0.0
        %417 = vmatpush1.msra.mxu0 %v353
        %418 = vmatprep.subr.mxu0 0.0
        %419 = vmatpush1.msra.mxu0 0.0
        %420 = vmatprep.subr.mxu0 0.0
        %421 = vmatpush1.msra.mxu0 0.0
        %422 = vmatprep.subr.mxu0 0.0
        %423 = vmatpush1.msra.mxu0 0.0
        %424 = vmatprep.subr.mxu0 0.0
        %425 = vmatpush1.msra.mxu0 0.0
        %426 = vmatprep.subr.mxu0 0.0
        %427 = vmatpush1.msra.mxu0 0.0
        %428 = vmatprep.subr.mxu0 0.0
        %429 = vmatpush1.msra.mxu0 0.0
        %430 = vmatprep.subr.mxu0 0.0
        %431 = vmatpush1.msra.mxu0 0.0
        %432 = vmatprep.subr.mxu0 0.0
        %433 = vmatpush1.msra.mxu0 0.0
        %434 = vmatprep.subr.mxu0 0.0
        %435 = vmatpush1.msra.mxu0 0.0
        %436 = vmatprep.subr.mxu0 0.0
        %437 = vmatpush1.msra.mxu0 0.0
        %438 = vmatprep.subr.mxu0 0.0
        %439 = vmatpush1.msra.mxu0 0.0
        %440 = vmatprep.subr.mxu0 0.0
        %441 = vmatpush1.msra.mxu0 0.0
        %442 = vmatprep.subr.mxu0 0.0
        %443 = vmatpush1.msra.mxu0 0.0
        %444 = vmatprep.subr.mxu0 0.0
        %445 = vmatpush1.msra.mxu0 0.0
        %446 = vmatprep.subr.mxu0 0.0
        %447 = vmatpush1.msra.mxu0 0.0
        %448 = vmatprep.subr.mxu0 0.0
        %449 = vmatpush1.msra.mxu0 0.0
        %450 = vmatprep.subr.mxu0 0.0
        %451 = vmatpush1.msra.mxu0 0.0
        %452 = vmatprep.subr.mxu0 0.0
        %453 = vmatpush1.msra.mxu0 0.0
        %454 = vmatprep.subr.mxu0 0.0
        %455 = vmatpush1.msra.mxu0 0.0
        %456 = vmatprep.subr.mxu0 0.0
        %457 = vmatpush1.msra.mxu0 0.0
        %458 = vmatprep.subr.mxu0 0.0
        %459 = vmatpush1.msra.mxu0 0.0
        %460 = vmatprep.subr.mxu0 0.0
        %461 = vmatpush1.msra.mxu0 0.0
        %462 = vmatprep.subr.mxu0 0.0
        %463 = vmatpush1.msra.mxu0 0.0
        %464 = vmatprep.subr.mxu0 0.0
        %465 = vmatpush1.msra.mxu0 0.0
        %466 = vmatprep.subr.mxu0 0.0
        %467 = vmatpush1.msra.mxu0 0.0
        %468 = vmatprep.subr.mxu0 0.0
        %469 = vmatpush1.msra.mxu0 0.0
        %470 = vmatprep.subr.mxu0 0.0
        %471 = vmatpush1.msra.mxu0 0.0
        %472 = vmatprep.subr.mxu0 0.0
        %473 = vmatpush1.msra.mxu0 0.0
        %474 = vmatprep.mubr.f32.mxu0 0.0
        %475 = vmatmul.mubr.f32.gmra.mrb[0].mxu0 %v363
        %v476 = vpop.f32.mrb[0].mxu0
        %v477 = vadd.f32 %v359, %v476
        %v478 = vpop.f32.mrb[0].mxu0
        %479 = vmatprep.mubr.f32.mxu0 0.0
        %480 = vmatmul.mubr.f32.gmra.mrb[0].mxu0 %v366
        %v481 = vpop.f32.mrb[0].mxu0
        %v482 = vadd.f32 %v359, %v481
        %v483 = vpop.f32.mrb[0].mxu0
        %484 = vmatprep.mubr.f32.mxu0 0.0
        %485 = vmatmul.mubr.f32.gmra.mrb[0].mxu0 %v369
        %v486 = vpop.f32.mrb[0].mxu0
        %v487 = vadd.f32 %v359, %v486
        %v488 = vpop.f32.mrb[0].mxu0
        %489 = vmatprep.mubr.f32.mxu0 0.0
        %490 = vmatmul.mubr.f32.gmra.mrb[0].mxu0 %v372
        %v491 = vpop.f32.mrb[0].mxu0
        %v492 = vadd.f32 %v359, %v491
        %v493 = vpop.f32.mrb[0].mxu0
        %494 = vmatprep.mubr.f32.mxu0 0.0
        %495 = vmatmul.mubr.f32.gmra.mrb[0].mxu0 %v375
        %v496 = vpop.f32.mrb[0].mxu0
        %v497 = vadd.f32 %v359, %v496
        %v498 = vpop.f32.mrb[0].mxu0
        %499 = vmatprep.mubr.f32.mxu0 0.0
        %500 = vmatmul.mubr.f32.gmra.mrb[0].mxu0 %v378
        %v501 = vpop.f32.mrb[0].mxu0
        %v502 = vadd.f32 %v359, %v501
        %v503 = vpop.f32.mrb[0].mxu0
        %504 = vmatprep.mubr.f32.mxu0 0.0
        %505 = vmatmul.mubr.f32.gmra.mrb[0].mxu0 %v381
        %v506 = vpop.f32.mrb[0].mxu0
        %v507 = vadd.f32 %v359, %v506
        %v508 = vpop.f32.mrb[0].mxu0
        %509 = vmatprep.mubr.f32.mxu0 0.0
        %510 = vmatmul.mubr.f32.gmra.mrb[0].mxu0 %v384
        %v511 = vpop.f32.mrb[0].mxu0
        %v512 = vadd.f32 %v359, %v511
        %v513 = vpop.f32.mrb[0].mxu0
        %514 = vmatprep.mubr.f32.mxu0 0.0
        %515 = vmatmul.mubr.f32.gmra.mrb[0].mxu0 %v387
        %v516 = vpop.f32.mrb[0].mxu0
        %v517 = vadd.f32 %v359, %v516
        %v518 = vpop.f32.mrb[0].mxu0
        %519 = vmatprep.mubr.f32.mxu0 0.0
        %520 = vmatmul.mubr.f32.gmra.mrb[0].mxu0 %v390
        %v521 = vpop.f32.mrb[0].mxu0
        %v522 = vadd.f32 %v359, %v521
        %v523 = vpop.f32.mrb[0].mxu0
        %524 = vmatprep.mubr.f32.mxu0 0.0
        %525 = vmatmul.mubr.f32.gmra.mrb[0].mxu0 %v393
        %v526 = vpop.f32.mrb[0].mxu0
        %v527 = vadd.f32 %v359, %v526
        %v528 = vpop.f32.mrb[0].mxu0
        %529 = vmatprep.mubr.f32.mxu0 0.0
        %530 = vmatmul.mubr.f32.gmra.mrb[0].mxu0 %v396
        %v531 = vpop.f32.mrb[0].mxu0
        %v532 = vadd.f32 %v359, %v531
        %v533 = vpop.f32.mrb[0].mxu0
        %534 = vmatprep.mubr.f32.mxu0 0.0
        %535 = vmatmul.mubr.f32.gmra.mrb[0].mxu0 %v399
        %v536 = vpop.f32.mrb[0].mxu0
        %v537 = vadd.f32 %v359, %v536
        %v538 = vpop.f32.mrb[0].mxu0
        %539 = vmatprep.mubr.f32.mxu0 0.0
        %540 = vmatmul.mubr.f32.gmra.mrb[0].mxu0 %v402
        %v541 = vpop.f32.mrb[0].mxu0
        %v542 = vadd.f32 %v359, %v541
        %v543 = vpop.f32.mrb[0].mxu0
        %544 = vmatprep.mubr.f32.mxu0 0.0
        %545 = vmatmul.mubr.f32.gmra.mrb[0].mxu0 %v405
        %v546 = vpop.f32.mrb[0].mxu0
        %v547 = vadd.f32 %v359, %v546
        %v548 = vpop.f32.mrb[0].mxu0
        %549 = vmatprep.mubr.f32.mxu0 0.0
        %550 = vmatmul.mubr.f32.gmra.mrb[0].mxu0 %v408
        %v551 = vpop.f32.mrb[0].mxu0
        %v552 = vadd.f32 %v359, %v551
        %v553 = vpop.f32.mrb[0].mxu0
        %554 = vdwg.mxu0
        %v555 = vmax.f32 %v477, 0.0
        %v556 = vmax.f32 %v482, 0.0
        %v557 = vmax.f32 %v487, 0.0
        %v558 = vmax.f32 %v492, 0.0
        %v559 = vmax.f32 %v497, 0.0
        %v560 = vmax.f32 %v502, 0.0
        %v561 = vmax.f32 %v507, 0.0
        %v562 = vmax.f32 %v512, 0.0
        %v563 = vmax.f32 %v517, 0.0
        %v564 = vmax.f32 %v522, 0.0
        %v565 = vmax.f32 %v527, 0.0
        %v566 = vmax.f32 %v532, 0.0
        %v567 = vmax.f32 %v537, 0.0
        %v568 = vmax.f32 %v542, 0.0
        %v569 = vmax.f32 %v547, 0.0
        %v570 = vmax.f32 %v552, 0.0
        %v571 = vld [vmem:[%s3] sm:$0xff]
        %v572 = vld [vmem:[%s3 + $0x8] sm:$0xff]
        %v573 = vld [vmem:[%s3 + $0x10] sm:$0xff]
        %v574 = vld [vmem:[%s3 + $0x18] sm:$0xff]
        %v575 = vld [vmem:[%s3 + $0x20] sm:$0xff]
        %v576 = vld [vmem:[%s3 + $0x28] sm:$0xff]
        %v577 = vld [vmem:[%s3 + $0x30] sm:$0xff]
        %v578 = vld [vmem:[%s3 + $0x38] sm:$0xff]
        %v579 = vld [vmem:[%s4] sm:$0x1]
        %v581 = vlaneseq
        %v582 = vshrl.u32 %v581, 7
        %v583 = vsub.s32 0, %v582
        %v584 = vrot.slane %v579, %v583
        %vm586 = vcmask 523264
        %v588 = vsel %vm586, %v555, 0
        %v591 = vsel %vm586, %v556, 0
        %v594 = vsel %vm586, %v557, 0
        %v597 = vsel %vm586, %v558, 0
        %v600 = vsel %vm586, %v559, 0
        %v603 = vsel %vm586, %v560, 0
        %v606 = vsel %vm586, %v561, 0
        %v609 = vsel %vm586, %v562, 0
        %v612 = vsel %vm586, %v563, 0
        %v615 = vsel %vm586, %v564, 0
        %v618 = vsel %vm586, %v565, 0
        %v621 = vsel %vm586, %v566, 0
        %v624 = vsel %vm586, %v567, 0
        %v627 = vsel %vm586, %v568, 0
        %v630 = vsel %vm586, %v569, 0
        %v633 = vsel %vm586, %v570, 0
        %635 = vmatprep.subr.mxu0 0.0
        %636 = vmatpush1.msra.mxu0 %v571
        %637 = vmatprep.subr.mxu0 0.0
        %638 = vmatpush1.msra.mxu0 %v572
        %639 = vmatprep.subr.mxu0 0.0
        %640 = vmatpush1.msra.mxu0 %v573
        %641 = vmatprep.subr.mxu0 0.0
        %642 = vmatpush1.msra.mxu0 %v574
        %643 = vmatprep.subr.mxu0 0.0
        %644 = vmatpush1.msra.mxu0 %v575
        %645 = vmatprep.subr.mxu0 0.0
        %646 = vmatpush1.msra.mxu0 %v576
        %647 = vmatprep.subr.mxu0 0.0
        %648 = vmatpush1.msra.mxu0 %v577
        %649 = vmatprep.subr.mxu0 0.0
        %650 = vmatpush1.msra.mxu0 %v578
        %651 = vmatprep.subr.mxu0 0.0
        %652 = vmatpush1.msra.mxu0 0.0
        %653 = vmatprep.subr.mxu0 0.0
        %654 = vmatpush1.msra.mxu0 0.0
        %655 = vmatprep.subr.mxu0 0.0
        %656 = vmatpush1.msra.mxu0 0.0
        %657 = vmatprep.subr.mxu0 0.0
        %658 = vmatpush1.msra.mxu0 0.0
        %659 = vmatprep.subr.mxu0 0.0
        %660 = vmatpush1.msra.mxu0 0.0
        %661 = vmatprep.subr.mxu0 0.0
        %662 = vmatpush1.msra.mxu0 0.0
        %663 = vmatprep.subr.mxu0 0.0
        %664 = vmatpush1.msra.mxu0 0.0
        %665 = vmatprep.subr.mxu0 0.0
        %666 = vmatpush1.msra.mxu0 0.0
        %667 = vmatprep.subr.mxu0 0.0
        %668 = vmatpush1.msra.mxu0 0.0
        %669 = vmatprep.subr.mxu0 0.0
        %670 = vmatpush1.msra.mxu0 0.0
        %671 = vmatprep.subr.mxu0 0.0
        %672 = vmatpush1.msra.mxu0 0.0
        %673 = vmatprep.subr.mxu0 0.0
        %674 = vmatpush1.msra.mxu0 0.0
        %675 = vmatprep.subr.mxu0 0.0
        %676 = vmatpush1.msra.mxu0 0.0
        %677 = vmatprep.subr.mxu0 0.0
        %678 = vmatpush1.msra.mxu0 0.0
        %679 = vmatprep.subr.mxu0 0.0
        %680 = vmatpush1.msra.mxu0 0.0
        %681 = vmatprep.subr.mxu0 0.0
        %682 = vmatpush1.msra.mxu0 0.0
        %683 = vmatprep.subr.mxu0 0.0
        %684 = vmatpush1.msra.mxu0 0.0
        %685 = vmatprep.subr.mxu0 0.0
        %686 = vmatpush1.msra.mxu0 0.0
        %687 = vmatprep.subr.mxu0 0.0
        %688 = vmatpush1.msra.mxu0 0.0
        %689 = vmatprep.subr.mxu0 0.0
        %690 = vmatpush1.msra.mxu0 0.0
        %691 = vmatprep.subr.mxu0 0.0
        %692 = vmatpush1.msra.mxu0 0.0
        %693 = vmatprep.subr.mxu0 0.0
        %694 = vmatpush1.msra.mxu0 0.0
        %695 = vmatprep.subr.mxu0 0.0
        %696 = vmatpush1.msra.mxu0 0.0
        %697 = vmatprep.subr.mxu0 0.0
        %698 = vmatpush1.msra.mxu0 0.0
        %699 = vmatprep.mubr.f32.mxu0 0.0
        %700 = vmatmul.mubr.f32.gmra.mrb[0].mxu0 %v588
        %v701 = vpop.f32.mrb[0].mxu0
        %v702 = vadd.f32 %v584, %v701
        %v703 = vpop.f32.mrb[0].mxu0
        %704 = vmatprep.mubr.f32.mxu0 0.0
        %705 = vmatmul.mubr.f32.gmra.mrb[0].mxu0 %v591
        %v706 = vpop.f32.mrb[0].mxu0
        %v707 = vadd.f32 %v584, %v706
        %v708 = vpop.f32.mrb[0].mxu0
        %709 = vmatprep.mubr.f32.mxu0 0.0
        %710 = vmatmul.mubr.f32.gmra.mrb[0].mxu0 %v594
        %v711 = vpop.f32.mrb[0].mxu0
        %v712 = vadd.f32 %v584, %v711
        %v713 = vpop.f32.mrb[0].mxu0
        %714 = vmatprep.mubr.f32.mxu0 0.0
        %715 = vmatmul.mubr.f32.gmra.mrb[0].mxu0 %v597
        %v716 = vpop.f32.mrb[0].mxu0
        %v717 = vadd.f32 %v584, %v716
        %v718 = vpop.f32.mrb[0].mxu0
        %719 = vmatprep.mubr.f32.mxu0 0.0
        %720 = vmatmul.mubr.f32.gmra.mrb[0].mxu0 %v600
        %v721 = vpop.f32.mrb[0].mxu0
        %v722 = vadd.f32 %v584, %v721
        %v723 = vpop.f32.mrb[0].mxu0
        %724 = vmatprep.mubr.f32.mxu0 0.0
        %725 = vmatmul.mubr.f32.gmra.mrb[0].mxu0 %v603
        %v726 = vpop.f32.mrb[0].mxu0
        %v727 = vadd.f32 %v584, %v726
        %v728 = vpop.f32.mrb[0].mxu0
        %729 = vmatprep.mubr.f32.mxu0 0.0
        %730 = vmatmul.mubr.f32.gmra.mrb[0].mxu0 %v606
        %v731 = vpop.f32.mrb[0].mxu0
        %v732 = vadd.f32 %v584, %v731
        %v733 = vpop.f32.mrb[0].mxu0
        %734 = vmatprep.mubr.f32.mxu0 0.0
        %735 = vmatmul.mubr.f32.gmra.mrb[0].mxu0 %v609
        %v736 = vpop.f32.mrb[0].mxu0
        %v737 = vadd.f32 %v584, %v736
        %v738 = vpop.f32.mrb[0].mxu0
        %739 = vmatprep.mubr.f32.mxu0 0.0
        %740 = vmatmul.mubr.f32.gmra.mrb[0].mxu0 %v612
        %v741 = vpop.f32.mrb[0].mxu0
        %v742 = vadd.f32 %v584, %v741
        %v743 = vpop.f32.mrb[0].mxu0
        %744 = vmatprep.mubr.f32.mxu0 0.0
        %745 = vmatmul.mubr.f32.gmra.mrb[0].mxu0 %v615
        %v746 = vpop.f32.mrb[0].mxu0
        %v747 = vadd.f32 %v584, %v746
        %v748 = vpop.f32.mrb[0].mxu0
        %749 = vmatprep.mubr.f32.mxu0 0.0
        %750 = vmatmul.mubr.f32.gmra.mrb[0].mxu0 %v618
        %v751 = vpop.f32.mrb[0].mxu0
        %v752 = vadd.f32 %v584, %v751
        %v753 = vpop.f32.mrb[0].mxu0
        %754 = vmatprep.mubr.f32.mxu0 0.0
        %755 = vmatmul.mubr.f32.gmra.mrb[0].mxu0 %v621
        %v756 = vpop.f32.mrb[0].mxu0
        %v757 = vadd.f32 %v584, %v756
        %v758 = vpop.f32.mrb[0].mxu0
        %759 = vmatprep.mubr.f32.mxu0 0.0
        %760 = vmatmul.mubr.f32.gmra.mrb[0].mxu0 %v624
        %v761 = vpop.f32.mrb[0].mxu0
        %v762 = vadd.f32 %v584, %v761
        %v763 = vpop.f32.mrb[0].mxu0
        %764 = vmatprep.mubr.f32.mxu0 0.0
        %765 = vmatmul.mubr.f32.gmra.mrb[0].mxu0 %v627
        %v766 = vpop.f32.mrb[0].mxu0
        %v767 = vadd.f32 %v584, %v766
        %v768 = vpop.f32.mrb[0].mxu0
        %769 = vmatprep.mubr.f32.mxu0 0.0
        %770 = vmatmul.mubr.f32.gmra.mrb[0].mxu0 %v630
        %v771 = vpop.f32.mrb[0].mxu0
        %v772 = vadd.f32 %v584, %v771
        %v773 = vpop.f32.mrb[0].mxu0
        %774 = vmatprep.mubr.f32.mxu0 0.0
        %775 = vmatmul.mubr.f32.gmra.mrb[0].mxu0 %v633
        %v776 = vpop.f32.mrb[0].mxu0
        %v777 = vadd.f32 %v584, %v776
        %v778 = vpop.f32.mrb[0].mxu0
        %779 = vdwg.mxu0
        %v780 = vmax.f32 %v702, 0.0
        %v781 = vmax.f32 %v707, 0.0
        %v782 = vmax.f32 %v712, 0.0
        %v783 = vmax.f32 %v717, 0.0
        %v784 = vmax.f32 %v722, 0.0
        %v785 = vmax.f32 %v727, 0.0
        %v786 = vmax.f32 %v732, 0.0
        %v787 = vmax.f32 %v737, 0.0
        %v788 = vmax.f32 %v742, 0.0
        %v789 = vmax.f32 %v747, 0.0
        %v790 = vmax.f32 %v752, 0.0
        %v791 = vmax.f32 %v757, 0.0
        %v792 = vmax.f32 %v762, 0.0
        %v793 = vmax.f32 %v767, 0.0
        %v794 = vmax.f32 %v772, 0.0
        %v795 = vmax.f32 %v777, 0.0
        %v796 = vld [vmem:[%s5] sm:$0xff]
        %v797 = vld [vmem:[%s5 + $0x8] sm:$0xff]
        %v798 = vld [vmem:[%s5 + $0x10] sm:$0xff]
        %v799 = vld [vmem:[%s5 + $0x18] sm:$0xff]
        %v800 = vld [vmem:[%s5 + $0x20] sm:$0xff]
        %v801 = vld [vmem:[%s5 + $0x28] sm:$0xff]
        %v802 = vld [vmem:[%s5 + $0x30] sm:$0xff]
        %v803 = vld [vmem:[%s5 + $0x38] sm:$0xff]
        %v804 = vld [vmem:[%s5 + $0x40] sm:$0xff]
        %v805 = vld [vmem:[%s5 + $0x48] sm:$0xff]
        %v806 = vld [vmem:[%s5 + $0x50] sm:$0xff]
        %v807 = vld [vmem:[%s5 + $0x58] sm:$0xff]
        %v808 = vld [vmem:[%s5 + $0x60] sm:$0xff]
        %v809 = vld [vmem:[%s5 + $0x68] sm:$0xff]
        %v810 = vld [vmem:[%s5 + $0x70] sm:$0xff]
        %v811 = vld [vmem:[%s5 + $0x78] sm:$0xff]
        %v812 = vld [vmem:[%s6] sm:$0x1]
        %v814 = vlaneseq
        %v815 = vshrl.u32 %v814, 7
        %v816 = vsub.s32 0, %v815
        %v817 = vrot.slane %v812, %v816
        %819 = vmatprep.subr.mxu0 0.0
        %820 = vmatpush1.msra.mxu0 %v796
        %821 = vmatprep.subr.mxu0 0.0
        %822 = vmatpush1.msra.mxu0 %v797
        %823 = vmatprep.subr.mxu0 0.0
        %824 = vmatpush1.msra.mxu0 %v798
        %825 = vmatprep.subr.mxu0 0.0
        %826 = vmatpush1.msra.mxu0 %v799
        %827 = vmatprep.subr.mxu0 0.0
        %828 = vmatpush1.msra.mxu0 %v800
        %829 = vmatprep.subr.mxu0 0.0
        %830 = vmatpush1.msra.mxu0 %v801
        %831 = vmatprep.subr.mxu0 0.0
        %832 = vmatpush1.msra.mxu0 %v802
        %833 = vmatprep.subr.mxu0 0.0
        %834 = vmatpush1.msra.mxu0 %v803
        %835 = vmatprep.subr.mxu0 0.0
        %836 = vmatpush1.msra.mxu0 %v804
        %837 = vmatprep.subr.mxu0 0.0
        %838 = vmatpush1.msra.mxu0 %v805
        %839 = vmatprep.subr.mxu0 0.0
        %840 = vmatpush1.msra.mxu0 %v806
        %841 = vmatprep.subr.mxu0 0.0
        %842 = vmatpush1.msra.mxu0 %v807
        %843 = vmatprep.subr.mxu0 0.0
        %844 = vmatpush1.msra.mxu0 %v808
        %845 = vmatprep.subr.mxu0 0.0
        %846 = vmatpush1.msra.mxu0 %v809
        %847 = vmatprep.subr.mxu0 0.0
        %848 = vmatpush1.msra.mxu0 %v810
        %849 = vmatprep.subr.mxu0 0.0
        %850 = vmatpush1.msra.mxu0 %v811
        %851 = vmatprep.subr.mxu0 0.0
        %852 = vmatpush1.msra.mxu0 0.0
        %853 = vmatprep.subr.mxu0 0.0
        %854 = vmatpush1.msra.mxu0 0.0
        %855 = vmatprep.subr.mxu0 0.0
        %856 = vmatpush1.msra.mxu0 0.0
        %857 = vmatprep.subr.mxu0 0.0
        %858 = vmatpush1.msra.mxu0 0.0
        %859 = vmatprep.subr.mxu0 0.0
        %860 = vmatpush1.msra.mxu0 0.0
        %861 = vmatprep.subr.mxu0 0.0
        %862 = vmatpush1.msra.mxu0 0.0
        %863 = vmatprep.subr.mxu0 0.0
        %864 = vmatpush1.msra.mxu0 0.0
        %865 = vmatprep.subr.mxu0 0.0
        %866 = vmatpush1.msra.mxu0 0.0
        %867 = vmatprep.subr.mxu0 0.0
        %868 = vmatpush1.msra.mxu0 0.0
        %869 = vmatprep.subr.mxu0 0.0
        %870 = vmatpush1.msra.mxu0 0.0
        %871 = vmatprep.subr.mxu0 0.0
        %872 = vmatpush1.msra.mxu0 0.0
        %873 = vmatprep.subr.mxu0 0.0
        %874 = vmatpush1.msra.mxu0 0.0
        %875 = vmatprep.subr.mxu0 0.0
        %876 = vmatpush1.msra.mxu0 0.0
        %877 = vmatprep.subr.mxu0 0.0
        %878 = vmatpush1.msra.mxu0 0.0
        %879 = vmatprep.subr.mxu0 0.0
        %880 = vmatpush1.msra.mxu0 0.0
        %881 = vmatprep.subr.mxu0 0.0
        %882 = vmatpush1.msra.mxu0 0.0
        %883 = vmatprep.mubr.f32.mxu0 0.0
        %884 = vmatmul.mubr.f32.gmra.mrb[0].mxu0 %v780
        %v885 = vpop.f32.mrb[0].mxu0
        %v886 = vadd.f32 %v817, %v885
        %v887 = vpop.f32.mrb[0].mxu0
        %888 = vmatprep.mubr.f32.mxu0 0.0
        %889 = vmatmul.mubr.f32.gmra.mrb[0].mxu0 %v781
        %v890 = vpop.f32.mrb[0].mxu0
        %v891 = vadd.f32 %v817, %v890
        %v892 = vpop.f32.mrb[0].mxu0
        %893 = vmatprep.mubr.f32.mxu0 0.0
        %894 = vmatmul.mubr.f32.gmra.mrb[0].mxu0 %v782
        %v895 = vpop.f32.mrb[0].mxu0
        %v896 = vadd.f32 %v817, %v895
        %v897 = vpop.f32.mrb[0].mxu0
        %898 = vmatprep.mubr.f32.mxu0 0.0
        %899 = vmatmul.mubr.f32.gmra.mrb[0].mxu0 %v783
        %v900 = vpop.f32.mrb[0].mxu0
        %v901 = vadd.f32 %v817, %v900
        %v902 = vpop.f32.mrb[0].mxu0
        %903 = vmatprep.mubr.f32.mxu0 0.0
        %904 = vmatmul.mubr.f32.gmra.mrb[0].mxu0 %v784
        %v905 = vpop.f32.mrb[0].mxu0
        %v906 = vadd.f32 %v817, %v905
        %v907 = vpop.f32.mrb[0].mxu0
        %908 = vmatprep.mubr.f32.mxu0 0.0
        %909 = vmatmul.mubr.f32.gmra.mrb[0].mxu0 %v785
        %v910 = vpop.f32.mrb[0].mxu0
        %v911 = vadd.f32 %v817, %v910
        %v912 = vpop.f32.mrb[0].mxu0
        %913 = vmatprep.mubr.f32.mxu0 0.0
        %914 = vmatmul.mubr.f32.gmra.mrb[0].mxu0 %v786
        %v915 = vpop.f32.mrb[0].mxu0
        %v916 = vadd.f32 %v817, %v915
        %v917 = vpop.f32.mrb[0].mxu0
        %918 = vmatprep.mubr.f32.mxu0 0.0
        %919 = vmatmul.mubr.f32.gmra.mrb[0].mxu0 %v787
        %v920 = vpop.f32.mrb[0].mxu0
        %v921 = vadd.f32 %v817, %v920
        %v922 = vpop.f32.mrb[0].mxu0
        %923 = vmatprep.mubr.f32.mxu0 0.0
        %924 = vmatmul.mubr.f32.gmra.mrb[0].mxu0 %v788
        %v925 = vpop.f32.mrb[0].mxu0
        %v926 = vadd.f32 %v817, %v925
        %v927 = vpop.f32.mrb[0].mxu0
        %928 = vmatprep.mubr.f32.mxu0 0.0
        %929 = vmatmul.mubr.f32.gmra.mrb[0].mxu0 %v789
        %v930 = vpop.f32.mrb[0].mxu0
        %v931 = vadd.f32 %v817, %v930
        %v932 = vpop.f32.mrb[0].mxu0
        %933 = vmatprep.mubr.f32.mxu0 0.0
        %934 = vmatmul.mubr.f32.gmra.mrb[0].mxu0 %v790
        %v935 = vpop.f32.mrb[0].mxu0
        %v936 = vadd.f32 %v817, %v935
        %v937 = vpop.f32.mrb[0].mxu0
        %938 = vmatprep.mubr.f32.mxu0 0.0
        %939 = vmatmul.mubr.f32.gmra.mrb[0].mxu0 %v791
        %v940 = vpop.f32.mrb[0].mxu0
        %v941 = vadd.f32 %v817, %v940
        %v942 = vpop.f32.mrb[0].mxu0
        %943 = vmatprep.mubr.f32.mxu0 0.0
        %944 = vmatmul.mubr.f32.gmra.mrb[0].mxu0 %v792
        %v945 = vpop.f32.mrb[0].mxu0
        %v946 = vadd.f32 %v817, %v945
        %v947 = vpop.f32.mrb[0].mxu0
        %948 = vmatprep.mubr.f32.mxu0 0.0
        %949 = vmatmul.mubr.f32.gmra.mrb[0].mxu0 %v793
        %v950 = vpop.f32.mrb[0].mxu0
        %v951 = vadd.f32 %v817, %v950
        %v952 = vpop.f32.mrb[0].mxu0
        %953 = vmatprep.mubr.f32.mxu0 0.0
        %954 = vmatmul.mubr.f32.gmra.mrb[0].mxu0 %v794
        %v955 = vpop.f32.mrb[0].mxu0
        %v956 = vadd.f32 %v817, %v955
        %v957 = vpop.f32.mrb[0].mxu0
        %958 = vmatprep.mubr.f32.mxu0 0.0
        %959 = vmatmul.mubr.f32.gmra.mrb[0].mxu0 %v795
        %v960 = vpop.f32.mrb[0].mxu0
        %v961 = vadd.f32 %v817, %v960
        %v962 = vpop.f32.mrb[0].mxu0
        %963 = vdwg.mxu0
        %v964 = vmax.f32 %v886, 0.0
        %v965 = vmax.f32 %v891, 0.0
        %v966 = vmax.f32 %v896, 0.0
        %v967 = vmax.f32 %v901, 0.0
        %v968 = vmax.f32 %v906, 0.0
        %v969 = vmax.f32 %v911, 0.0
        %v970 = vmax.f32 %v916, 0.0
        %v971 = vmax.f32 %v921, 0.0
        %v972 = vmax.f32 %v926, 0.0
        %v973 = vmax.f32 %v931, 0.0
        %v974 = vmax.f32 %v936, 0.0
        %v975 = vmax.f32 %v941, 0.0
        %v976 = vmax.f32 %v946, 0.0
        %v977 = vmax.f32 %v951, 0.0
        %v978 = vmax.f32 %v956, 0.0
        %v979 = vmax.f32 %v961, 0.0
        %v980 = vadd.f32 %v964, %v555
        %v981 = vadd.f32 %v965, %v556
        %v982 = vadd.f32 %v966, %v557
        %v983 = vadd.f32 %v967, %v558
        %v984 = vadd.f32 %v968, %v559
        %v985 = vadd.f32 %v969, %v560
        %v986 = vadd.f32 %v970, %v561
        %v987 = vadd.f32 %v971, %v562
        %v988 = vadd.f32 %v972, %v563
        %v989 = vadd.f32 %v973, %v564
        %v990 = vadd.f32 %v974, %v565
        %v991 = vadd.f32 %v975, %v566
        %v992 = vadd.f32 %v976, %v567
        %v993 = vadd.f32 %v977, %v568
        %v994 = vadd.f32 %v978, %v569
        %v995 = vadd.f32 %v979, %v570
        %v996 = vld [vmem:[%s7] sm:$0xff]
        %v997 = vld [vmem:[%s7 + $0x8] sm:$0xff]
        %v998 = vld [vmem:[%s7 + $0x10] sm:$0xff]
        %v999 = vld [vmem:[%s7 + $0x18] sm:$0xff]
        %v1000 = vld [vmem:[%s7 + $0x20] sm:$0xff]
        %v1001 = vld [vmem:[%s7 + $0x28] sm:$0xff]
        %v1002 = vld [vmem:[%s7 + $0x30] sm:$0xff]
        %v1003 = vld [vmem:[%s7 + $0x38] sm:$0xff]
        %v1004 = vld [vmem:[%s8] sm:$0x1]
        %v1006 = vlaneseq
        %v1007 = vshrl.u32 %v1006, 7
        %v1008 = vsub.s32 0, %v1007
        %v1009 = vrot.slane %v1004, %v1008
        %v1012 = vsel %vm586, %v980, 0
        %v1015 = vsel %vm586, %v981, 0
        %v1018 = vsel %vm586, %v982, 0
        %v1021 = vsel %vm586, %v983, 0
        %v1024 = vsel %vm586, %v984, 0
        %v1027 = vsel %vm586, %v985, 0
        %v1030 = vsel %vm586, %v986, 0
        %v1033 = vsel %vm586, %v987, 0
        %v1036 = vsel %vm586, %v988, 0
        %v1039 = vsel %vm586, %v989, 0
        %v1042 = vsel %vm586, %v990, 0
        %v1045 = vsel %vm586, %v991, 0
        %v1048 = vsel %vm586, %v992, 0
        %v1051 = vsel %vm586, %v993, 0
        %v1054 = vsel %vm586, %v994, 0
        %v1057 = vsel %vm586, %v995, 0
        %1059 = vmatprep.subr.mxu0 0.0
        %1060 = vmatpush1.msra.mxu0 %v996
        %1061 = vmatprep.subr.mxu0 0.0
        %1062 = vmatpush1.msra.mxu0 %v997
        %1063 = vmatprep.subr.mxu0 0.0
        %1064 = vmatpush1.msra.mxu0 %v998
        %1065 = vmatprep.subr.mxu0 0.0
        %1066 = vmatpush1.msra.mxu0 %v999
        %1067 = vmatprep.subr.mxu0 0.0
        %1068 = vmatpush1.msra.mxu0 %v1000
        %1069 = vmatprep.subr.mxu0 0.0
        %1070 = vmatpush1.msra.mxu0 %v1001
        %1071 = vmatprep.subr.mxu0 0.0
        %1072 = vmatpush1.msra.mxu0 %v1002
        %1073 = vmatprep.subr.mxu0 0.0
        %1074 = vmatpush1.msra.mxu0 %v1003
        %1075 = vmatprep.subr.mxu0 0.0
        %1076 = vmatpush1.msra.mxu0 0.0
        %1077 = vmatprep.subr.mxu0 0.0
        %1078 = vmatpush1.msra.mxu0 0.0
        %1079 = vmatprep.subr.mxu0 0.0
        %1080 = vmatpush1.msra.mxu0 0.0
        %1081 = vmatprep.subr.mxu0 0.0
        %1082 = vmatpush1.msra.mxu0 0.0
        %1083 = vmatprep.subr.mxu0 0.0
        %1084 = vmatpush1.msra.mxu0 0.0
        %1085 = vmatprep.subr.mxu0 0.0
        %1086 = vmatpush1.msra.mxu0 0.0
        %1087 = vmatprep.subr.mxu0 0.0
        %1088 = vmatpush1.msra.mxu0 0.0
        %1089 = vmatprep.subr.mxu0 0.0
        %1090 = vmatpush1.msra.mxu0 0.0
        %1091 = vmatprep.subr.mxu0 0.0
        %1092 = vmatpush1.msra.mxu0 0.0
        %1093 = vmatprep.subr.mxu0 0.0
        %1094 = vmatpush1.msra.mxu0 0.0
        %1095 = vmatprep.subr.mxu0 0.0
        %1096 = vmatpush1.msra.mxu0 0.0
        %1097 = vmatprep.subr.mxu0 0.0
        %1098 = vmatpush1.msra.mxu0 0.0
        %1099 = vmatprep.subr.mxu0 0.0
        %1100 = vmatpush1.msra.mxu0 0.0
        %1101 = vmatprep.subr.mxu0 0.0
        %1102 = vmatpush1.msra.mxu0 0.0
        %1103 = vmatprep.subr.mxu0 0.0
        %1104 = vmatpush1.msra.mxu0 0.0
        %1105 = vmatprep.subr.mxu0 0.0
        %1106 = vmatpush1.msra.mxu0 0.0
        %1107 = vmatprep.subr.mxu0 0.0
        %1108 = vmatpush1.msra.mxu0 0.0
        %1109 = vmatprep.subr.mxu0 0.0
        %1110 = vmatpush1.msra.mxu0 0.0
        %1111 = vmatprep.subr.mxu0 0.0
        %1112 = vmatpush1.msra.mxu0 0.0
        %1113 = vmatprep.subr.mxu0 0.0
        %1114 = vmatpush1.msra.mxu0 0.0
        %1115 = vmatprep.subr.mxu0 0.0
        %1116 = vmatpush1.msra.mxu0 0.0
        %1117 = vmatprep.subr.mxu0 0.0
        %1118 = vmatpush1.msra.mxu0 0.0
        %1119 = vmatprep.subr.mxu0 0.0
        %1120 = vmatpush1.msra.mxu0 0.0
        %1121 = vmatprep.subr.mxu0 0.0
        %1122 = vmatpush1.msra.mxu0 0.0
        %1123 = vmatprep.mubr.f32.mxu0 0.0
        %1124 = vmatmul.mubr.f32.gmra.mrb[0].mxu0 %v1012
        %v1125 = vpop.f32.mrb[0].mxu0
        %v1126 = vadd.f32 %v1009, %v1125
        %v1127 = vpop.f32.mrb[0].mxu0
        %1128 = vmatprep.mubr.f32.mxu0 0.0
        %1129 = vmatmul.mubr.f32.gmra.mrb[0].mxu0 %v1015
        %v1130 = vpop.f32.mrb[0].mxu0
        %v1131 = vadd.f32 %v1009, %v1130
        %v1132 = vpop.f32.mrb[0].mxu0
        %1133 = vmatprep.mubr.f32.mxu0 0.0
        %1134 = vmatmul.mubr.f32.gmra.mrb[0].mxu0 %v1018
        %v1135 = vpop.f32.mrb[0].mxu0
        %v1136 = vadd.f32 %v1009, %v1135
        %v1137 = vpop.f32.mrb[0].mxu0
        %1138 = vmatprep.mubr.f32.mxu0 0.0
        %1139 = vmatmul.mubr.f32.gmra.mrb[0].mxu0 %v1021
        %v1140 = vpop.f32.mrb[0].mxu0
        %v1141 = vadd.f32 %v1009, %v1140
        %v1142 = vpop.f32.mrb[0].mxu0
        %1143 = vmatprep.mubr.f32.mxu0 0.0
        %1144 = vmatmul.mubr.f32.gmra.mrb[0].mxu0 %v1024
        %v1145 = vpop.f32.mrb[0].mxu0
        %v1146 = vadd.f32 %v1009, %v1145
        %v1147 = vpop.f32.mrb[0].mxu0
        %1148 = vmatprep.mubr.f32.mxu0 0.0
        %1149 = vmatmul.mubr.f32.gmra.mrb[0].mxu0 %v1027
        %v1150 = vpop.f32.mrb[0].mxu0
        %v1151 = vadd.f32 %v1009, %v1150
        %v1152 = vpop.f32.mrb[0].mxu0
        %1153 = vmatprep.mubr.f32.mxu0 0.0
        %1154 = vmatmul.mubr.f32.gmra.mrb[0].mxu0 %v1030
        %v1155 = vpop.f32.mrb[0].mxu0
        %v1156 = vadd.f32 %v1009, %v1155
        %v1157 = vpop.f32.mrb[0].mxu0
        %1158 = vmatprep.mubr.f32.mxu0 0.0
        %1159 = vmatmul.mubr.f32.gmra.mrb[0].mxu0 %v1033
        %v1160 = vpop.f32.mrb[0].mxu0
        %v1161 = vadd.f32 %v1009, %v1160
        %v1162 = vpop.f32.mrb[0].mxu0
        %1163 = vmatprep.mubr.f32.mxu0 0.0
        %1164 = vmatmul.mubr.f32.gmra.mrb[0].mxu0 %v1036
        %v1165 = vpop.f32.mrb[0].mxu0
        %v1166 = vadd.f32 %v1009, %v1165
        %v1167 = vpop.f32.mrb[0].mxu0
        %1168 = vmatprep.mubr.f32.mxu0 0.0
        %1169 = vmatmul.mubr.f32.gmra.mrb[0].mxu0 %v1039
        %v1170 = vpop.f32.mrb[0].mxu0
        %v1171 = vadd.f32 %v1009, %v1170
        %v1172 = vpop.f32.mrb[0].mxu0
        %1173 = vmatprep.mubr.f32.mxu0 0.0
        %1174 = vmatmul.mubr.f32.gmra.mrb[0].mxu0 %v1042
        %v1175 = vpop.f32.mrb[0].mxu0
        %v1176 = vadd.f32 %v1009, %v1175
        %v1177 = vpop.f32.mrb[0].mxu0
        %1178 = vmatprep.mubr.f32.mxu0 0.0
        %1179 = vmatmul.mubr.f32.gmra.mrb[0].mxu0 %v1045
        %v1180 = vpop.f32.mrb[0].mxu0
        %v1181 = vadd.f32 %v1009, %v1180
        %v1182 = vpop.f32.mrb[0].mxu0
        %1183 = vmatprep.mubr.f32.mxu0 0.0
        %1184 = vmatmul.mubr.f32.gmra.mrb[0].mxu0 %v1048
        %v1185 = vpop.f32.mrb[0].mxu0
        %v1186 = vadd.f32 %v1009, %v1185
        %v1187 = vpop.f32.mrb[0].mxu0
        %1188 = vmatprep.mubr.f32.mxu0 0.0
        %1189 = vmatmul.mubr.f32.gmra.mrb[0].mxu0 %v1051
        %v1190 = vpop.f32.mrb[0].mxu0
        %v1191 = vadd.f32 %v1009, %v1190
        %v1192 = vpop.f32.mrb[0].mxu0
        %1193 = vmatprep.mubr.f32.mxu0 0.0
        %1194 = vmatmul.mubr.f32.gmra.mrb[0].mxu0 %v1054
        %v1195 = vpop.f32.mrb[0].mxu0
        %v1196 = vadd.f32 %v1009, %v1195
        %v1197 = vpop.f32.mrb[0].mxu0
        %1198 = vmatprep.mubr.f32.mxu0 0.0
        %1199 = vmatmul.mubr.f32.gmra.mrb[0].mxu0 %v1057
        %v1200 = vpop.f32.mrb[0].mxu0
        %v1201 = vadd.f32 %v1009, %v1200
        %v1202 = vpop.f32.mrb[0].mxu0
        %1203 = vdwg.mxu0
        %1204 = vst [vmem:[%s326] sm:$0xff] %v1126
        %1205 = vst [vmem:[%s326 + $0x8] sm:$0xff] %v1131
        %1206 = vst [vmem:[%s326 + $0x10] sm:$0xff] %v1136
        %1207 = vst [vmem:[%s326 + $0x18] sm:$0xff] %v1141
        %1208 = vst [vmem:[%s326 + $0x20] sm:$0xff] %v1146
        %1209 = vst [vmem:[%s326 + $0x28] sm:$0xff] %v1151
        %1210 = vst [vmem:[%s326 + $0x30] sm:$0xff] %v1156
        %1211 = vst [vmem:[%s326 + $0x38] sm:$0xff] %v1161
        %1212 = vst [vmem:[%s326 + $0x40] sm:$0xff] %v1166
        %1213 = vst [vmem:[%s326 + $0x48] sm:$0xff] %v1171
        %1214 = vst [vmem:[%s326 + $0x50] sm:$0xff] %v1176
        %1215 = vst [vmem:[%s326 + $0x58] sm:$0xff] %v1181
        %1216 = vst [vmem:[%s326 + $0x60] sm:$0xff] %v1186
        %1217 = vst [vmem:[%s326 + $0x68] sm:$0xff] %v1191
        %1218 = vst [vmem:[%s326 + $0x70] sm:$0xff] %v1196
        %1219 = vst [vmem:[%s326 + $0x78] sm:$0xff] %v1201
        %s1220 = sand.u32 %s225, 1
        %s1221 = scalar_lea.sflag [#allocation3], %s1220
        %s1222 = sand.u32 %s225, 1
        %s1223 = smul.addr %s1222, 128
        %s1224 = scalar_lea.vmem [#allocation2], %s1223
        // Predicated region
        $region57: #{tpu_custom_call.1} parent=55 // pred_check
          %p1225 = pneg %p235
        $region58: #{tpu_custom_call.1} parent=55 // pred_check_branch
          %1227 = sbr.rel (%p1225) target = $region60
        $region59: #{tpu_custom_call.1} parent=55 // pred_region
          %s1228 = smul.u32 16, %s23
          %s1230 = ssub.s32 2048, 2048
          %1231 = vsyncadd %s1221, %s1230
          %s1232 = smul.addr %s1228, 128
          %s1233 = scalar_lea.hbm %s9, %s1232
          %s1234 = sshll.u32 %s1224, 4
          %s1235 = int_to_ptr.vmem [resolvable:$true] %s1234
          %1240 = dma.vmem_to_hbm [thread:$0]  %s1235, 2048, %s1233, %s1221, 128, 128, 8
        $region60: #{tpu_custom_call.1} parent=55 // pred_fallthru
          _
      $region56: #{tpu_custom_call.1} parent=5 // pred_fallthru
        _
      %p1241 = scmp.le.s32.totalorder 2, %s18
      // Predicated region
      $region61: #{tpu_custom_call.1} parent=5 // pred_check
        %p1242 = pneg %p1241
      $region62: #{tpu_custom_call.1} parent=5 // pred_check_branch
        %1244 = sbr.rel (%p1242) target = $region64
      $region63: #{tpu_custom_call.1} parent=5 // pred_region
        %s1245 = ssub.s32 %s18, 2
        // Predicated region
        $region65: #{tpu_custom_call.1} parent=63 // pred_check
          %p1246 = pneg %p241
        $region66: #{tpu_custom_call.1} parent=63 // pred_check_branch
          %1248 = sbr.rel (%p1246) target = $region68
        $region67: #{tpu_custom_call.1} parent=63 // pred_region
          %s1249 = sand.u32 %s226, 1
          %s1250 = scalar_lea.sflag [#allocation3], %s1249
          %s1251 = sand.u32 %s226, 1
          %s1252 = smul.addr %s1251, 128
          %s1253 = scalar_lea.vmem [#allocation2], %s1252
          %1254 = dma.done %s1250, 2048
        $region68: #{tpu_custom_call.1} parent=63 // pred_fallthru
          _
      $region64: #{tpu_custom_call.1} parent=5 // pred_fallthru
        _
    $region6: #{tpu_custom_call.1} parent=1 // loop_footer
      %s22 = sadd.s32 1, %s18
    $region7: #{tpu_custom_call.1} parent=1 // loop_footer_branch
      %17 = sbr.rel target = $region3
    $region8: #{tpu_custom_call.1} parent=1 // loop_exit
      _
    %1255 = vsyncpa [#allocation3], 1
    %s1256 = scalar_lea.sflag [#allocation3], 1
    %1257 = vsyncpa %s1256, 1

</llo_original>
